<compile_context>
chip_gen: v5e
topology: v5e:2x2
jax: 0.10.0
libtpu: 0.0.40
codegen_flags: <defaults>
</compile_context>

<pallas_src>
import functools

import jax
import jax.numpy as jnp
from jax.experimental import pallas as pl
from jax.experimental.pallas import tpu as pltpu


def _round_up(x: int, m: int) -> int:
    return (x + m - 1) // m * m


def _vmem_capacity_bytes() -> int:
    """Physical VMEM per TensorCore (128 MiB v5e/v6e, 64 MiB v7x)."""
    try:
        info = pltpu.get_tpu_info()
        cap = int(getattr(info, "vmem_capacity_bytes", 0))
        if cap > 0:
            return cap
    except Exception:
        pass
    return 64 << 20  # conservative fallback (v7x per-TensorCore VMEM)


def ffn_kernel(alpha_ref, x_ref, w1_ref, b1_ref, w2_ref, b2_ref, o_ref, *scratch):
    """Grid = (M tiles, F tiles).  F axis is a reduction ('arbitrary').

    The output block index (i, 0) is k-invariant, so o_ref stays VMEM-resident
    across the whole F reduction and doubles as the f32 accumulator.
    """
    k = pl.program_id(1)
    nk = pl.num_programs(1)

    if scratch:
        # Hoisted x -> compute_dtype cast: done once per M tile and reused for
        # every F tile instead of re-casting the (TM, Dp) block each step.
        xc_ref = scratch[0]

        @pl.when(k == 0)
        def _():
            xc_ref[...] = x_ref[...].astype(xc_ref.dtype)

        xc = xc_ref[...]
    else:
        xc = x_ref[...]  # compute dtype == f32: no cast needed

    # h_k = relu(x @ W1_t[:, k-tile] + b1[k-tile]); bias/ReLU are per hidden
    # column, so evaluating them per F tile is exact.
    h = jnp.dot(xc, w1_ref[...], preferred_element_type=jnp.float32)
    h = jnp.maximum(h + b1_ref[...], 0.0)                       # (TM, TF) f32

    partial = jnp.dot(h.astype(w2_ref.dtype), w2_ref[...],
                      preferred_element_type=jnp.float32)       # (TM, Dp) f32

    @pl.when(k == 0)
    def _():
        o_ref[...] = partial          # first partial: assign (no zero+add pass)

    @pl.when(k > 0)
    def _():
        o_ref[...] += partial

    @pl.when(k == nk - 1)
    def _():
        # Finalize: out = x + (acc + b2) * alpha   (bias, scale, residual; f32)
        o_ref[...] = (x_ref[...]
                      + (o_ref[...] + b2_ref[...]) * alpha_ref[0]
                      ).astype(o_ref.dtype)


@functools.partial(jax.jit, static_argnames=("tile_m", "tile_f", "compute_dtype"))
def feed_forward_module(x, w1_t, b1, w2_t, b2, alpha, *,
                        tile_m=None,
                        tile_f=None,
                        compute_dtype=jnp.bfloat16):
    """x: (M, D) f32.  w1_t: (D, F).  w2_t: (F, D).  alpha: scalar.

    Returns x + (relu(x @ w1_t + b1) @ w2_t + b2) * alpha, shape (M, D), f32.
    """
    M, D = x.shape
    F = w1_t.shape[1]
    c_bytes = jnp.dtype(compute_dtype).itemsize
    cast_needed = jnp.dtype(compute_dtype) != jnp.dtype(jnp.float32)

    vmem_cap = _vmem_capacity_bytes()
    big_vmem = vmem_cap >= (96 << 20)          # v5e/v6e: 128 MiB; v7x: 64 MiB

    d_pad = _round_up(D, 128)

    # Generation-aware tile defaults (overridable via static args).
    if tile_m is None:
        tile_m = 512 if (big_vmem and M >= 1024) else 256
    if tile_f is None:
        tile_f = 1024 if big_vmem else 512
    # Small-M (decode) cases: pad rows only to the 8-row f32 sublane granule.
    tile_m = min(tile_m, _round_up(M, 8))
    tile_f = min(tile_f, _round_up(F, 128))

    def budget(tm, tf):
        return (2 * tm * d_pad * 4                    # x tiles (double-buffered)
                + 2 * tm * d_pad * 4                  # out tiles (= accumulator)
                + 2 * d_pad * tf * c_bytes            # W1 tiles
                + 2 * tf * d_pad * c_bytes            # W2 tiles
                + 2 * (tf + d_pad) * 4                # biases
                + (tm * d_pad * c_bytes if cast_needed else 0)  # hoisted x cast
                + 2 * tm * tf * 4)                    # hidden intermediate

    budget_cap = max(vmem_cap - (8 << 20), 16 << 20)  # leave compiler headroom
    # Shrink tiles if the derived footprint would not fit the budget.
    while budget(tile_m, tile_f) + (4 << 20) > budget_cap and tile_f > 256:
        tile_f = max(128, (tile_f // 2) // 128 * 128)
    while budget(tile_m, tile_f) + (4 << 20) > budget_cap and tile_m > 128:
        tile_m = max(8, (tile_m // 2) // 8 * 8)

    m_pad = _round_up(M, tile_m)
    f_pad = _round_up(F, tile_f)

    # Zero padding is exact: padded x/W1 rows contribute 0 to the first matmul,
    # padded hidden columns give relu(0+0)=0 and hit zero W2 rows, padded D
    # output columns are sliced off below.  All pads/casts are no-ops when the
    # caller passes pre-padded weights already in `compute_dtype` (recommended
    # for repeated calls: pad/cast the weights once outside the hot loop).
    x_p = jnp.pad(x.astype(jnp.float32), ((0, m_pad - M), (0, d_pad - D)))
    w1_p = jnp.pad(w1_t.astype(compute_dtype), ((0, d_pad - D), (0, f_pad - F)))
    w2_p = jnp.pad(w2_t.astype(compute_dtype), ((0, f_pad - F), (0, d_pad - D)))
    b1_p = jnp.pad(b1.astype(jnp.float32), (0, f_pad - F)).reshape(1, f_pad)
    b2_p = jnp.pad(b2.astype(jnp.float32), (0, d_pad - D)).reshape(1, d_pad)
    alpha_arr = jnp.asarray(alpha, jnp.float32).reshape(1)

    grid = (m_pad // tile_m, f_pad // tile_f)
    n_m_tiles = grid[0]

    vmem_limit = max(16 << 20,
                     min(int(budget(tile_m, tile_f)) + (8 << 20), budget_cap))

    # Weights are re-streamed from HBM once per M tile.
    weight_bytes = (w1_p.size + w2_p.size) * c_bytes + (b1_p.size + b2_p.size) * 4
    cost = pl.CostEstimate(
        flops=2 * 2 * m_pad * d_pad * f_pad,
        transcendentals=0,
        bytes_accessed=int(x_p.size * 4 + m_pad * d_pad * 4
                           + n_m_tiles * weight_bytes),
    )

    scratch_shapes = []
    if cast_needed:
        scratch_shapes.append(pltpu.VMEM((tile_m, d_pad), compute_dtype))

    out_padded = pl.pallas_call(
        ffn_kernel,
        out_shape=jax.ShapeDtypeStruct((m_pad, d_pad), jnp.float32),
        grid_spec=pltpu.PrefetchScalarGridSpec(
            num_scalar_prefetch=0,
            grid=grid,
            in_specs=[
                pl.BlockSpec(memory_space=pltpu.SMEM),                # alpha
                pl.BlockSpec((tile_m, d_pad), lambda i, k: (i, 0)),   # x
                pl.BlockSpec((d_pad, tile_f), lambda i, k: (0, k)),   # W1_t
                pl.BlockSpec((1, tile_f), lambda i, k: (0, k)),       # b1
                pl.BlockSpec((tile_f, d_pad), lambda i, k: (k, 0)),   # W2_t
                pl.BlockSpec((1, d_pad), lambda i, k: (0, 0)),        # b2
            ],
            out_specs=pl.BlockSpec((tile_m, d_pad), lambda i, k: (i, 0)),
            scratch_shapes=scratch_shapes,
        ),
        compiler_params=pltpu.CompilerParams(
            dimension_semantics=("parallel", "arbitrary"),
            vmem_limit_bytes=int(vmem_limit),
        ),
        cost_estimate=cost,
    )(alpha_arr, x_p, w1_p, b1_p, w2_p, b2_p)

    return out_padded[:M, :D]


if __name__ == "__main__":
    # Small shapes consistent with the module: batch=2, seq=8, emb_dim=32, ff_dim=64
    batch, seq, emb_dim, ff_dim = 2, 8, 32, 64

    key = jax.random.PRNGKey(0)
    kx, kw1, kb1, kw2, kb2 = jax.random.split(key, 5)

    x = jax.random.normal(kx, (batch, seq, emb_dim), dtype=jnp.float32)

    # nn.Linear(emb, ff): weight (ff, emb), bias (ff,). Kernel takes transposed weights.
    w1 = jax.random.normal(kw1, (ff_dim, emb_dim), dtype=jnp.float32) * 0.1
    b1 = jax.random.normal(kb1, (ff_dim,), dtype=jnp.float32) * 0.1
    w2 = jax.random.normal(kw2, (emb_dim, ff_dim), dtype=jnp.float32) * 0.1
    b2 = jax.random.normal(kb2, (emb_dim,), dtype=jnp.float32) * 0.1
    alpha = jnp.float32(0.5)  # PyTorch init is 0; nonzero exercises the full path

    x_2d = x.reshape(batch * seq, emb_dim)

    # Pure-JAX reference (high precision).
    h_ref = jnp.maximum(
        jnp.dot(x_2d, w1.T, precision=jax.lax.Precision.HIGHEST) + b1, 0.0)
    ref = (x_2d + (jnp.dot(h_ref, w2.T, precision=jax.lax.Precision.HIGHEST)
                   + b2) * alpha).reshape(batch, seq, emb_dim)

    # 1) Exact-semantics run (f32 matmuls on the MXU).
    out_f32 = feed_forward_module(x_2d, w1.T, b1, w2.T, b2, alpha,
                                  compute_dtype=jnp.float32)
    out_f32 = out_f32.reshape(batch, seq, emb_dim)
    jax.block_until_ready(out_f32)
    assert jnp.allclose(out_f32, ref, atol=1e-3, rtol=1e-3), "f32 kernel mismatch"

    # 2) Fast path: bf16 matmul operands, f32 accumulation / residual.
    out_bf16 = feed_forward_module(x_2d, w1.T, b1, w2.T, b2, alpha,
                                   compute_dtype=jnp.bfloat16)
    out_bf16 = out_bf16.reshape(batch, seq, emb_dim)
    jax.block_until_ready(out_bf16)
    assert jnp.allclose(out_bf16, ref, atol=3e-2, rtol=3e-2), "bf16 kernel mismatch"

    print("KERNEL_OK")
</pallas_src>

<mosaic_0001>
module attributes {stable_mosaic.version = 11 : i64} {
  func.func @ffn_kernel(%arg0: i32, %arg1: i32, %arg2: memref<1xf32, #tpu.memory_space<smem>>, %arg3: memref<16x128xf32, #tpu.memory_space<vmem>>, %arg4: memref<128x128xf32, #tpu.memory_space<vmem>>, %arg5: memref<1x128xf32, #tpu.memory_space<vmem>>, %arg6: memref<128x128xf32, #tpu.memory_space<vmem>>, %arg7: memref<1x128xf32, #tpu.memory_space<vmem>>, %arg8: memref<16x128xf32, #tpu.memory_space<vmem>>) attributes {dimension_semantics = [#tpu.dimension_semantics<parallel>, #tpu.dimension_semantics<arbitrary>], iteration_bounds = array<i64: 1, 1>, scalar_prefetch = 0 : i64, scratch_operands = 0 : i64, tpu.core_type = #tpu.core_type<tc>, window_params = [{transform_indices = @transform_0, window_bounds = array<i64: 1>}, {transform_indices = @transform_1, window_bounds = array<i64: 16, 128>}, {transform_indices = @transform_2, window_bounds = array<i64: 128, 128>}, {transform_indices = @transform_3, window_bounds = array<i64: 1, 128>}, {transform_indices = @transform_4, window_bounds = array<i64: 128, 128>}, {pipeline_mode = #tpu.pipeline_mode<synchronous>, transform_indices = @transform_5, window_bounds = array<i64: 1, 128>}, {transform_indices = @transform_6, window_bounds = array<i64: 16, 128>}]} {
    %c0 = arith.constant 0 : index
    %c0_0 = arith.constant 0 : index
    %0 = vector.load %arg3[%c0, %c0_0] : memref<16x128xf32, #tpu.memory_space<vmem>>, vector<16x128xf32>
    %c0_1 = arith.constant 0 : index
    %c0_2 = arith.constant 0 : index
    %1 = vector.load %arg4[%c0_1, %c0_2] : memref<128x128xf32, #tpu.memory_space<vmem>>, vector<128x128xf32>
    %cst = arith.constant dense<0.000000e+00> : vector<16x128xf32>
    %2 = tpu.matmul %0, %1, %cst {dimension_numbers = #tpu.dot_dimension_numbers<[1], [0], [0], [1], [0, 0, 1, 1], [], []>} : vector<16x128xf32>, vector<128x128xf32>, vector<16x128xf32> -> vector<16x128xf32>
    %c0_3 = arith.constant 0 : index
    %c0_4 = arith.constant 0 : index
    %3 = vector.load %arg5[%c0_3, %c0_4] : memref<1x128xf32, #tpu.memory_space<vmem>>, vector<1x128xf32>
    %4 = vector.broadcast %3 : vector<1x128xf32> to vector<16x128xf32>
    %5 = arith.addf %2, %4 : vector<16x128xf32>
    %cst_5 = arith.constant 0.000000e+00 : f32
    %6 = vector.broadcast %cst_5 : f32 to vector<16x128xf32>
    %7 = arith.maximumf %5, %6 : vector<16x128xf32>
    %c0_6 = arith.constant 0 : index
    %c0_7 = arith.constant 0 : index
    %8 = vector.load %arg6[%c0_6, %c0_7] : memref<128x128xf32, #tpu.memory_space<vmem>>, vector<128x128xf32>
    %cst_8 = arith.constant dense<0.000000e+00> : vector<16x128xf32>
    %9 = tpu.matmul %7, %8, %cst_8 {dimension_numbers = #tpu.dot_dimension_numbers<[1], [0], [0], [1], [0, 0, 1, 1], [], []>} : vector<16x128xf32>, vector<128x128xf32>, vector<16x128xf32> -> vector<16x128xf32>
    %c0_i32 = arith.constant 0 : i32
    %10 = arith.cmpi eq, %arg1, %c0_i32 : i32
    %11 = arith.extui %10 : i1 to i32
    %c0_i32_9 = arith.constant 0 : i32
    %12 = arith.cmpi ne, %11, %c0_i32_9 : i32
    scf.if %12 {
      %c0_14 = arith.constant 0 : index
      %c0_15 = arith.constant 0 : index
      %19 = vector.load %arg8[%c0_14, %c0_15] : memref<16x128xf32, #tpu.memory_space<vmem>>, vector<16x128xf32>
      tpu.vector_store %arg8[%c0_14, %c0_15], %9 {strides = array<i32>} : memref<16x128xf32, #tpu.memory_space<vmem>>, vector<16x128xf32>,
    } else {
    }
    %c0_i32_10 = arith.constant 0 : i32
    %13 = arith.cmpi sgt, %arg1, %c0_i32_10 : i32
    %14 = arith.extui %13 : i1 to i32
    %c0_i32_11 = arith.constant 0 : i32
    %15 = arith.cmpi ne, %14, %c0_i32_11 : i32
    scf.if %15 {
      %c0_14 = arith.constant 0 : index
      %c0_15 = arith.constant 0 : index
      %19 = vector.load %arg8[%c0_14, %c0_15] : memref<16x128xf32, #tpu.memory_space<vmem>>, vector<16x128xf32>
      %20 = arith.addf %19, %9 : vector<16x128xf32>
      %c0_16 = arith.constant 0 : index
      %c0_17 = arith.constant 0 : index
      %21 = vector.load %arg8[%c0_16, %c0_17] : memref<16x128xf32, #tpu.memory_space<vmem>>, vector<16x128xf32>
      tpu.vector_store %arg8[%c0_16, %c0_17], %20 {strides = array<i32>} : memref<16x128xf32, #tpu.memory_space<vmem>>, vector<16x128xf32>,
    } else {
    }
    %c0_i32_12 = arith.constant 0 : i32
    %16 = arith.cmpi eq, %arg1, %c0_i32_12 : i32
    %17 = arith.extui %16 : i1 to i32
    %c0_i32_13 = arith.constant 0 : i32
    %18 = arith.cmpi ne, %17, %c0_i32_13 : i32
    scf.if %18 {
      %c0_14 = arith.constant 0 : index
      %c0_15 = arith.constant 0 : index
      %19 = vector.load %arg3[%c0_14, %c0_15] : memref<16x128xf32, #tpu.memory_space<vmem>>, vector<16x128xf32>
      %c0_16 = arith.constant 0 : index
      %c0_17 = arith.constant 0 : index
      %20 = vector.load %arg8[%c0_16, %c0_17] : memref<16x128xf32, #tpu.memory_space<vmem>>, vector<16x128xf32>
      %c0_18 = arith.constant 0 : index
      %c0_19 = arith.constant 0 : index
      %21 = vector.load %arg7[%c0_18, %c0_19] : memref<1x128xf32, #tpu.memory_space<vmem>>, vector<1x128xf32>
      %22 = vector.broadcast %21 : vector<1x128xf32> to vector<16x128xf32>
      %23 = arith.addf %20, %22 : vector<16x128xf32>
      %c0_20 = arith.constant 0 : index
      %24 = memref.load %arg2[%c0_20] : memref<1xf32, #tpu.memory_space<smem>>
      %25 = vector.broadcast %24 : f32 to vector<16x128xf32>
      %26 = arith.mulf %23, %25 : vector<16x128xf32>
      %27 = arith.addf %19, %26 : vector<16x128xf32>
      %c0_21 = arith.constant 0 : index
      %c0_22 = arith.constant 0 : index
      %28 = vector.load %arg8[%c0_21, %c0_22] : memref<16x128xf32, #tpu.memory_space<vmem>>, vector<16x128xf32>
      tpu.vector_store %arg8[%c0_21, %c0_22], %27 {strides = array<i32>} : memref<16x128xf32, #tpu.memory_space<vmem>>, vector<16x128xf32>,
    } else {
    }
    return
  }
  func.func @transform_0(%arg0: i32, %arg1: i32) -> i32 {
    %c0_i32 = arith.constant 0 : i32
    %c0_i32_0 = arith.constant 0 : i32
    return %c0_i32 : i32
  }
  func.func @transform_1(%arg0: i32, %arg1: i32) -> (i32, i32) {
    %c0_i32 = arith.constant 0 : i32
    %c0_i32_0 = arith.constant 0 : i32
    return %arg0, %c0_i32 : i32, i32
  }
  func.func @transform_2(%arg0: i32, %arg1: i32) -> (i32, i32) {
    %c0_i32 = arith.constant 0 : i32
    %c0_i32_0 = arith.constant 0 : i32
    return %c0_i32, %arg1 : i32, i32
  }
  func.func @transform_3(%arg0: i32, %arg1: i32) -> (i32, i32) {
    %c0_i32 = arith.constant 0 : i32
    %c0_i32_0 = arith.constant 0 : i32
    return %c0_i32, %arg1 : i32, i32
  }
  func.func @transform_4(%arg0: i32, %arg1: i32) -> (i32, i32) {
    %c0_i32 = arith.constant 0 : i32
    %c0_i32_0 = arith.constant 0 : i32
    return %arg1, %c0_i32 : i32, i32
  }
  func.func @transform_5(%arg0: i32, %arg1: i32) -> (i32, i32) {
    %c0_i32 = arith.constant 0 : i32
    %c0_i32_0 = arith.constant 0 : i32
    %c0_i32_1 = arith.constant 0 : i32
    return %c0_i32, %c0_i32_0 : i32, i32
  }
  func.func @transform_6(%arg0: i32, %arg1: i32) -> (i32, i32) {
    %c0_i32 = arith.constant 0 : i32
    %c0_i32_0 = arith.constant 0 : i32
    return %arg0, %c0_i32 : i32, i32
  }
}

</mosaic_0001>

<llo_original>
// kernel: feed_forward_module.1
$region0: #{feed_forward_module.1}
  #allocation0 [shape = 'u32[]', space=smem, size = 0x4, offset = 0x4, fixed_abs, tag = 'smem constant byte address 0x4 - core index']
  #allocation1 [shape = 'u32[72,128]{1,0:T(1,128)}', space=vmem, size = 0x9000, scoped, tag = 'internal scratch']
  #allocation2 [shape = 'f32[1]{0:T(128)S(6)}', space=smem, size = 0x200, scoped, tag = 'scoped memory for feed_forward_module.1']
  %s0 = inlined_call_operand.<no memory space> [shape: f32[1], index: 0, kind: input, shape index: {}]
  %s1 = inlined_call_operand.vmem [shape: f32[16,128], index: 1, kind: input, shape index: {}]
  %s2 = inlined_call_operand.vmem [shape: f32[128,128], index: 2, kind: input, shape index: {}]
  %s3 = inlined_call_operand.vmem [shape: f32[1,128], index: 3, kind: input, shape index: {}]
  %s4 = inlined_call_operand.vmem [shape: f32[128,128], index: 4, kind: input, shape index: {}]
  %s5 = inlined_call_operand.vmem [shape: f32[1,128], index: 5, kind: input, shape index: {}]
  %s6 = inlined_call_operand.hbm [shape: f32[16,128], index: 6, kind: output, shape index: {}]
  %s7 = sld [smem:[#allocation0]]
  $region46: #{feed_forward_module.1} parent=0
    _
  %s9 = ssub.s32 1, %s7
  %s10 = scalar_select 0, %s9, %s7
  %11 = sst [smem:[#allocation2]] %s0
  $region1: #{feed_forward_module.1} parent=0
    #allocation3 [shape = 'u8[8192]{0}', space=vmem, size = 0x2000, scoped, tag = 'output window, operand 0, single buffered']
    #allocation4 [shape = 's32[1]{0}', space=sflag, size = 0x4, scoped, tag = 'scoped memory for feed_forward_module.1']
    %12 = vsyncpa [#allocation4], 0
    // Predicated region
    $region2: #{feed_forward_module.1} parent=1 // pred_check
      _
    $region3: #{feed_forward_module.1} parent=1 // pred_check_branch
      %14 = sbr.rel (0) target = $region5
    $region4: #{feed_forward_module.1} parent=1 // pred_region
      _
    $region5: #{feed_forward_module.1} parent=1 // pred_fallthru
      _
    // Predicated region
    $region6: #{feed_forward_module.1} parent=1 // pred_check
      _
    $region7: #{feed_forward_module.1} parent=1 // pred_check_branch
      %16 = sbr.rel (0) target = $region9
    $region8: #{feed_forward_module.1} parent=1 // pred_region
      _
    $region9: #{feed_forward_module.1} parent=1 // pred_fallthru
      _
    // Predicated region
    $region10: #{feed_forward_module.1} parent=1 // pred_check
      _
    $region11: #{feed_forward_module.1} parent=1 // pred_check_branch
      %18 = sbr.rel (0) target = $region13
    $region12: #{feed_forward_module.1} parent=1 // pred_region
      _
    $region13: #{feed_forward_module.1} parent=1 // pred_fallthru
      _
    // Predicated region
    $region14: #{feed_forward_module.1} parent=1 // pred_check
      _
    $region15: #{feed_forward_module.1} parent=1 // pred_check_branch
      %20 = sbr.rel (0) target = $region17
    $region16: #{feed_forward_module.1} parent=1 // pred_region
      _
    $region17: #{feed_forward_module.1} parent=1 // pred_fallthru
      _
    // Predicated region
    $region18: #{feed_forward_module.1} parent=1 // pred_check
      _
    $region19: #{feed_forward_module.1} parent=1 // pred_check_branch
      %22 = sbr.rel (0) target = $region21
    $region20: #{feed_forward_module.1} parent=1 // pred_region
      _
    $region21: #{feed_forward_module.1} parent=1 // pred_fallthru
      _
    // Predicated region
    $region22: #{feed_forward_module.1} parent=1 // pred_check
      _
    $region23: #{feed_forward_module.1} parent=1 // pred_check_branch
      %24 = sbr.rel (0) target = $region25
    $region24: #{feed_forward_module.1} parent=1 // pred_region
      _
    $region25: #{feed_forward_module.1} parent=1 // pred_fallthru
      _
    %v25 = vld [vmem:[%s1] sm:$0xff]
    %v26 = vld [vmem:[%s1 + $0x8] sm:$0xff]
    %v27 = vld [vmem:[%s2] sm:$0xff]
    %v28 = vld [vmem:[%s2 + $0x8] sm:$0xff]
    %v29 = vld [vmem:[%s2 + $0x10] sm:$0xff]
    %v30 = vld [vmem:[%s2 + $0x18] sm:$0xff]
    %v31 = vld [vmem:[%s2 + $0x20] sm:$0xff]
    %v32 = vld [vmem:[%s2 + $0x28] sm:$0xff]
    %v33 = vld [vmem:[%s2 + $0x30] sm:$0xff]
    %v34 = vld [vmem:[%s2 + $0x38] sm:$0xff]
    %v35 = vld [vmem:[%s2 + $0x40] sm:$0xff]
    %v36 = vld [vmem:[%s2 + $0x48] sm:$0xff]
    %v37 = vld [vmem:[%s2 + $0x50] sm:$0xff]
    %v38 = vld [vmem:[%s2 + $0x58] sm:$0xff]
    %v39 = vld [vmem:[%s2 + $0x60] sm:$0xff]
    %v40 = vld [vmem:[%s2 + $0x68] sm:$0xff]
    %v41 = vld [vmem:[%s2 + $0x70] sm:$0xff]
    %v42 = vld [vmem:[%s2 + $0x78] sm:$0xff]
    %v43 = vld [vmem:[%s3] sm:$0x1]
    %v45 = vperm.slane %v43, 0
    %47 = vmatpush.msra.mxu0 %v42
    %48 = vmatpush.msra.mxu0 %v41
    %49 = vmatpush.msra.mxu0 %v40
    %50 = vmatpush.msra.mxu0 %v39
    %51 = vmatpush.msra.mxu0 %v38
    %52 = vmatpush.msra.mxu0 %v37
    %53 = vmatpush.msra.mxu0 %v36
    %54 = vmatpush.msra.mxu0 %v35
    %55 = vmatpush.msra.mxu0 %v34
    %56 = vmatpush.msra.mxu0 %v33
    %57 = vmatpush.msra.mxu0 %v32
    %58 = vmatpush.msra.mxu0 %v31
    %59 = vmatpush.msra.mxu0 %v30
    %60 = vmatpush.msra.mxu0 %v29
    %61 = vmatpush.msra.mxu0 %v28
    %62 = vmatpush.msra.mxu0 %v27
    %63 = vmatmul.f32.gmra.mxu0 %v25
    %v64 = vpop.f32.mrf.mxu0
    %v65 = vadd.f32 %v45, %v64
    %66 = vmatmul.f32.gmra.mxu0 %v26
    %v67 = vpop.f32.mrf.mxu0
    %v68 = vadd.f32 %v45, %v67
    %69 = vdwg.mxu0
    %v70 = vmax.f32 %v65, 0.0
    %v71 = vmax.f32 %v68, 0.0
    %v72 = vld [vmem:[%s4] sm:$0xff]
    %v73 = vld [vmem:[%s4 + $0x8] sm:$0xff]
    %v74 = vld [vmem:[%s4 + $0x10] sm:$0xff]
    %v75 = vld [vmem:[%s4 + $0x18] sm:$0xff]
    %v76 = vld [vmem:[%s4 + $0x20] sm:$0xff]
    %v77 = vld [vmem:[%s4 + $0x28] sm:$0xff]
    %v78 = vld [vmem:[%s4 + $0x30] sm:$0xff]
    %v79 = vld [vmem:[%s4 + $0x38] sm:$0xff]
    %v80 = vld [vmem:[%s4 + $0x40] sm:$0xff]
    %v81 = vld [vmem:[%s4 + $0x48] sm:$0xff]
    %v82 = vld [vmem:[%s4 + $0x50] sm:$0xff]
    %v83 = vld [vmem:[%s4 + $0x58] sm:$0xff]
    %v84 = vld [vmem:[%s4 + $0x60] sm:$0xff]
    %v85 = vld [vmem:[%s4 + $0x68] sm:$0xff]
    %v86 = vld [vmem:[%s4 + $0x70] sm:$0xff]
    %v87 = vld [vmem:[%s4 + $0x78] sm:$0xff]
    %88 = vmatpush.msra.mxu0 %v87
    %89 = vmatpush.msra.mxu0 %v86
    %90 = vmatpush.msra.mxu0 %v85
    %91 = vmatpush.msra.mxu0 %v84
    %92 = vmatpush.msra.mxu0 %v83
    %93 = vmatpush.msra.mxu0 %v82
    %94 = vmatpush.msra.mxu0 %v81
    %95 = vmatpush.msra.mxu0 %v80
    %96 = vmatpush.msra.mxu0 %v79
    %97 = vmatpush.msra.mxu0 %v78
    %98 = vmatpush.msra.mxu0 %v77
    %99 = vmatpush.msra.mxu0 %v76
    %100 = vmatpush.msra.mxu0 %v75
    %101 = vmatpush.msra.mxu0 %v74
    %102 = vmatpush.msra.mxu0 %v73
    %103 = vmatpush.msra.mxu0 %v72
    %104 = vmatmul.f32.gmra.mxu0 %v70
    %v105 = vpop.f32.mrf.mxu0
    %v106 = vadd.f32 0.0, %v105
    %107 = vmatmul.f32.gmra.mxu0 %v71
    %v108 = vpop.f32.mrf.mxu0
    %v109 = vadd.f32 0.0, %v108
    %110 = vdwg.mxu0
    %p111 = scmp.eq.s32.totalorder 0, 0
    // Predicated region
    $region26: #{feed_forward_module.1} parent=1 // pred_check
      %p112 = pneg %p111
    $region27: #{feed_forward_module.1} parent=1 // pred_check_branch
      %114 = sbr.rel (%p112) target = $region29
    $region28: #{feed_forward_module.1} parent=1 // pred_region
      %115 = vst [vmem:[#allocation3] sm:$0xff] %v106
      %116 = vst [vmem:[#allocation3 + $0x8] sm:$0xff] %v109
    $region29: #{feed_forward_module.1} parent=1 // pred_fallthru
      _
    %p117 = scmp.gt.s32.totalorder 0, 0
    // Predicated region
    $region30: #{feed_forward_module.1} parent=1 // pred_check
      %p118 = pneg %p117
    $region31: #{feed_forward_module.1} parent=1 // pred_check_branch
      %120 = sbr.rel (%p118) target = $region33
    $region32: #{feed_forward_module.1} parent=1 // pred_region
      %v121 = vld [vmem:[#allocation3] sm:$0xff]
      %v122 = vld [vmem:[#allocation3 + $0x8] sm:$0xff]
      %v123 = vadd.f32 %v121, %v106
      %v124 = vadd.f32 %v122, %v109
      %125 = vst [vmem:[#allocation3] sm:$0xff] %v123
      %126 = vst [vmem:[#allocation3 + $0x8] sm:$0xff] %v124
    $region33: #{feed_forward_module.1} parent=1 // pred_fallthru
      _
    // Predicated region
    $region34: #{feed_forward_module.1} parent=1 // pred_check
      %p127 = pneg %p111
    $region35: #{feed_forward_module.1} parent=1 // pred_check_branch
      %129 = sbr.rel (%p127) target = $region37
    $region36: #{feed_forward_module.1} parent=1 // pred_region
      %v130 = vld [vmem:[%s1] sm:$0xff]
      %v131 = vld [vmem:[%s1 + $0x8] sm:$0xff]
      %v132 = vld [vmem:[#allocation3] sm:$0xff]
      %v133 = vld [vmem:[#allocation3 + $0x8] sm:$0xff]
      %v134 = vld [vmem:[%s5] sm:$0x1]
      %v136 = vperm.slane %v134, 0
      %v138 = vadd.f32 %v132, %v136
      %v139 = vadd.f32 %v133, %v136
      %s140 = sld [smem:[#allocation2]]
      %v141 = vstv %s140
      %v142 = vmul.f32 %v138, %v141
      %v143 = vmul.f32 %v139, %v141
      %v144 = vadd.f32 %v130, %v142
      %v145 = vadd.f32 %v131, %v143
      %146 = vst [vmem:[#allocation3] sm:$0xff] %v144
      %147 = vst [vmem:[#allocation3 + $0x8] sm:$0xff] %v145
    $region37: #{feed_forward_module.1} parent=1 // pred_fallthru
      _
    // Predicated region
    $region38: #{feed_forward_module.1} parent=1 // pred_check
      _
    $region39: #{feed_forward_module.1} parent=1 // pred_check_branch
      %149 = sbr.rel (0) target = $region41
    $region40: #{feed_forward_module.1} parent=1 // pred_region
      %151 = vsyncadd [#allocation4], 0
      %s152 = sshll.u32 [#allocation3], 4
      %s153 = int_to_ptr.vmem [resolvable:$true] %s152
      %s154 = sshll.u32 %s6, 4
      %s155 = int_to_ptr.hbm [resolvable:$true] %s154
      %160 = dma.vmem_to_hbm [thread:$0]  %s153, 256, %s155, [#allocation4], 128, 128, 8
    $region41: #{feed_forward_module.1} parent=1 // pred_fallthru
      _
    // Predicated region
    $region42: #{feed_forward_module.1} parent=1 // pred_check
      _
    $region43: #{feed_forward_module.1} parent=1 // pred_check_branch
      %162 = sbr.rel (0) target = $region45
    $region44: #{feed_forward_module.1} parent=1 // pred_region
      %164 = dma.done [#allocation4], 256
    $region45: #{feed_forward_module.1} parent=1 // pred_fallthru
      _
    %165 = vsyncpa [#allocation4], 1

</llo_original>
